<compile_context>
chip_gen: v7x
topology: tpu7x:2x2x1
jax: 0.10.0
libtpu: 0.0.40
codegen_flags: <defaults>
</compile_context>

<pallas_src>
import functools

import jax
import jax.numpy as jnp
from jax import lax
from jax.experimental import pallas as pl
from jax.experimental.pallas import tpu as pltpu

LANES = 128
_TILE_ELEMS_DEFAULT = 8192 * 128   # ~4 MiB f32 per input per buffer (v6e / v7x)
_TILE_ELEMS_V5E = 4096 * 128       # v5e: smaller scoped-VMEM default, slower HBM
_VMEM_LIMIT_BYTES = 48 << 20       # < 64 MiB physical on v7x; ample headroom
_MAX_NATURAL_WIDTH = 16384         # gate for the copy-free (rows, last_dim) view


def _device_kind():
    try:
        return jax.devices()[0].device_kind.lower()
    except Exception:
        return ""


@functools.lru_cache(maxsize=None)
def _chip_config():
    """Returns (target_tile_elems, max_tensorcores) for the local chip."""
    kind = _device_kind()
    is_v5e = ("v5 lite" in kind) or ("v5e" in kind) or ("v5lite" in kind)
    single_tc = is_v5e or ("v6 lite" in kind) or ("v6e" in kind)
    tile_elems = _TILE_ELEMS_V5E if is_v5e else _TILE_ELEMS_DEFAULT
    return tile_elems, (1 if single_tc else 2)


def _l1_sum_kernel(x_ref, y_ref, o_ref, *, rows, width, acc_rows,
                   tiles_per_core, total_rows, mask_start):
    c = pl.program_id(0)            # core ("parallel") axis
    j = pl.program_id(1)            # row-tile reduction axis
    t = c * tiles_per_core + j      # virtual (unclamped) tile index

    @pl.when(j == 0)
    def _init():
        o_ref[...] = jnp.zeros_like(o_ref)

    # In-kernel cast: bf16 inputs stream half the HBM bytes; |x - y| in f32.
    diff = jnp.abs(x_ref[...].astype(jnp.float32) -
                   y_ref[...].astype(jnp.float32))
    groups = rows // acc_rows

    def _accumulate(d):
        # Pure VPU adds into a multi-vreg resident accumulator (the output
        # block): `groups` independent (acc_rows, width) slabs folded together.
        o_ref[...] += d.reshape(groups, acc_rows, width).sum(axis=0)

    if mask_start is None:
        # Static fast path: tiles exactly cover the array, no masking anywhere.
        _accumulate(diff)
    else:
        @pl.when(t < mask_start)
        def _full_tile():
            _accumulate(diff)

        @pl.when(t >= mask_start)
        def _edge_tile():
            # Partial last tile / phantom tiles of the core split: zero out
            # rows past the real data (select, not multiply, so stale / NaN
            # bytes in the padded part of the edge block are dropped safely).
            row_ids = t * rows + lax.broadcasted_iota(jnp.int32, (rows, 1), 0)
            _accumulate(jnp.where(row_ids < total_rows, diff, 0.0))


def _pallas_abs_diff_sum(x2d, y2d):
    """sum(|x2d - y2d|) in f32 for a fully-valid 2-D slab."""
    rows_total, width = x2d.shape
    tile_elems, max_cores = _chip_config()

    # Biggest row tile that fits the per-buffer VMEM budget (multiple of 8),
    # or the full array when it is small.
    rows = max(tile_elems // width, 8)
    rows -= rows % 8
    if rows >= rows_total:
        rows = rows_total
    n_tiles = -(-rows_total // rows)

    # Shard row tiles across the two TensorCores of v7x; single-TC v5e/v6e use
    # a singleton axis (no phantom-tile DMA, no extra bookkeeping).
    n_cores = max_cores if n_tiles >= 2 else 1
    tiles_per_core = -(-n_tiles // n_cores)

    partial_edge = (rows_total % rows) != 0
    phantom_tiles = (n_cores * tiles_per_core) != n_tiles
    if partial_edge:
        mask_start = n_tiles - 1
    elif phantom_tiles:
        mask_start = n_tiles
    else:
        mask_start = None          # masking compiled out entirely

    # Accumulator height: 32 rows (4+ vregs of independent partial sums) when
    # the tile allows it; degrade gracefully for small / odd row counts.
    if rows % 32 == 0:
        acc_rows = 32
    elif rows % 8 == 0:
        acc_rows = 8
    else:
        acc_rows = rows

    def in_map(c, j):
        # Clamp phantom / edge tile indices so every DMA stays in bounds; the
        # edge block is partial (Pallas clamps the copy) and its out-of-range
        # rows are masked to zero inside the kernel.
        return (jnp.minimum(c * tiles_per_core + j, n_tiles - 1), 0)

    kernel = functools.partial(
        _l1_sum_kernel, rows=rows, width=width, acc_rows=acc_rows,
        tiles_per_core=tiles_per_core, total_rows=rows_total,
        mask_start=mask_start)

    partials = pl.pallas_call(
        kernel,
        out_shape=jax.ShapeDtypeStruct((n_cores * acc_rows, width), jnp.float32),
        grid_spec=pltpu.PrefetchScalarGridSpec(
            num_scalar_prefetch=0,
            grid=(n_cores, tiles_per_core),
            in_specs=[pl.BlockSpec((rows, width), in_map),
                      pl.BlockSpec((rows, width), in_map)],
            out_specs=pl.BlockSpec((acc_rows, width), lambda c, j: (c, 0)),
        ),
        compiler_params=pltpu.CompilerParams(
            dimension_semantics=("parallel", "arbitrary"),
            vmem_limit_bytes=_VMEM_LIMIT_BYTES),
    )(x2d, y2d)

    # Tiny lane-dense slab; the single cross-lane reduction happens here.
    return jnp.sum(partials, dtype=jnp.float32)


@functools.partial(jax.jit, static_argnames=("reduction",))
def color_loss(x, y, reduction="sum"):
    """Pallas implementation of ColorLoss.forward (torch.nn.L1Loss)."""
    assert x.shape == y.shape, "L1Loss requires matching shapes"
    if reduction not in ("sum", "mean"):
        # TODO(synk): reduction='none' (elementwise tensor output) not implemented;
        # the module default is 'sum'.
        raise NotImplementedError(f"unsupported reduction: {reduction}")

    n = x.size
    out_dtype = x.dtype
    if n == 0:
        return jnp.zeros((), out_dtype)

    xf = x.reshape(-1)
    yf = y.reshape(-1)
    tail = n % LANES

    if tail == 0:
        # Lane-dense (n/128, 128) view: free reshape, zero copies.
        total = _pallas_abs_diff_sum(xf.reshape(n // LANES, LANES),
                                     yf.reshape(n // LANES, LANES))
    elif x.ndim >= 1 and LANES <= x.shape[-1] <= _MAX_NATURAL_WIDTH:
        # Ragged total size but a lane-friendly last dim: keep the natural
        # (rows, last_dim) 2-D view -- still a free reshape, no pad / copy.
        w = x.shape[-1]
        total = _pallas_abs_diff_sum(x.reshape(-1, w), y.reshape(-1, w))
    else:
        # Ragged size with an awkward last dim: kernel over the 128-aligned
        # prefix, plus a <128-element jnp tail (no full-array pad).
        m = n // LANES
        total = jnp.zeros((), jnp.float32)
        if m > 0:
            total = _pallas_abs_diff_sum(xf[: m * LANES].reshape(m, LANES),
                                         yf[: m * LANES].reshape(m, LANES))
        xt = xf[m * LANES:].astype(jnp.float32)
        yt = yf[m * LANES:].astype(jnp.float32)
        total = total + jnp.sum(jnp.abs(xt - yt))

    if reduction == "mean":
        total = total / jnp.float32(n)
    return total.astype(out_dtype)


if __name__ == "__main__":
    key = jax.random.PRNGKey(0)
    k = jax.random.split(key, 8)

    # NCHW image-style inputs (numel % 128 == 0 -> lane-dense aligned path).
    x = jax.random.normal(k[0], (2, 4, 16, 16), dtype=jnp.float32)
    y = jax.random.normal(k[1], (2, 4, 16, 16), dtype=jnp.float32)
    loss = color_loss(x, y, reduction="sum")
    jax.block_until_ready(loss)
    ref = jnp.sum(jnp.abs(x - y))
    assert jnp.allclose(loss, ref, rtol=1e-5, atol=1e-3), (loss, ref)

    # mean reduction on the same inputs.
    loss_m = color_loss(x, y, reduction="mean")
    ref_m = jnp.mean(jnp.abs(x - y))
    assert jnp.allclose(loss_m, ref_m, rtol=1e-5, atol=1e-5), (loss_m, ref_m)

    # Ragged numel (540000 % 128 != 0) with a lane-friendly last dim (300):
    # exercises the copy-free (rows, last_dim) path.
    x2 = jax.random.normal(k[2], (2, 3, 300, 300), dtype=jnp.float32)
    y2 = jax.random.normal(k[3], (2, 3, 300, 300), dtype=jnp.float32)
    loss2 = color_loss(x2, y2, reduction="sum")
    jax.block_until_ready(loss2)
    ref2 = jnp.sum(jnp.abs(x2 - y2))
    assert jnp.allclose(loss2, ref2, rtol=1e-4, atol=1e-2), (loss2, ref2)

    # Aligned but multi-tile: exercises the big row tiles, the gated edge-tile
    # mask, and (on multi-TC chips) the 2-core split.
    x3 = jax.random.normal(k[4], (2, 4, 384, 384), dtype=jnp.float32)
    y3 = jax.random.normal(k[5], (2, 4, 384, 384), dtype=jnp.float32)
    loss3 = color_loss(x3, y3, reduction="sum")
    jax.block_until_ready(loss3)
    ref3 = jnp.sum(jnp.abs(x3 - y3))
    assert jnp.allclose(loss3, ref3, rtol=1e-4, atol=1e-1), (loss3, ref3)

    # Ragged numel with an awkward tiny last dim (13): aligned-prefix kernel
    # plus the <128-element jnp tail.
    x4 = jax.random.normal(k[6], (2, 3, 7, 13), dtype=jnp.float32)
    y4 = jax.random.normal(k[7], (2, 3, 7, 13), dtype=jnp.float32)
    loss4 = color_loss(x4, y4, reduction="sum")
    jax.block_until_ready(loss4)
    ref4 = jnp.sum(jnp.abs(x4 - y4))
    assert jnp.allclose(loss4, ref4, rtol=1e-5, atol=1e-3), (loss4, ref4)

    print("KERNEL_OK")
</pallas_src>

<mosaic_0001>
module attributes {stable_mosaic.version = 11 : i64} {
  func.func @_l1_sum_kernel(%arg0: i32, %arg1: i32, %arg2: memref<16x128xf32, #tpu.memory_space<vmem>>, %arg3: memref<16x128xf32, #tpu.memory_space<vmem>>, %arg4: memref<8x128xf32, #tpu.memory_space<vmem>>) attributes {dimension_semantics = [#tpu.dimension_semantics<parallel>, #tpu.dimension_semantics<arbitrary>], iteration_bounds = array<i64: 1, 1>, scalar_prefetch = 0 : i64, scratch_operands = 0 : i64, tpu.core_type = #tpu.core_type<tc>, window_params = [{transform_indices = @transform_0, window_bounds = array<i64: 16, 128>}, {transform_indices = @transform_1, window_bounds = array<i64: 16, 128>}, {transform_indices = @transform_2, window_bounds = array<i64: 8, 128>}]} {
    %c0_i32 = arith.constant 0 : i32
    %0 = arith.cmpi eq, %arg1, %c0_i32 : i32
    %1 = arith.extui %0 : i1 to i32
    %c0_i32_0 = arith.constant 0 : i32
    %2 = arith.cmpi ne, %1, %c0_i32_0 : i32
    scf.if %2 {
      %cst_8 = arith.constant 0.000000e+00 : f32
      %12 = vector.broadcast %cst_8 : f32 to vector<8x128xf32>
      %c0_9 = arith.constant 0 : index
      %c0_10 = arith.constant 0 : index
      %13 = vector.load %arg4[%c0_9, %c0_10] : memref<8x128xf32, #tpu.memory_space<vmem>>, vector<8x128xf32>
      tpu.vector_store %arg4[%c0_9, %c0_10], %12 {strides = array<i32>} : memref<8x128xf32, #tpu.memory_space<vmem>>, vector<8x128xf32>,
    } else {
    }
    %c0 = arith.constant 0 : index
    %c0_1 = arith.constant 0 : index
    %3 = vector.load %arg2[%c0, %c0_1] : memref<16x128xf32, #tpu.memory_space<vmem>>, vector<16x128xf32>
    %c0_2 = arith.constant 0 : index
    %c0_3 = arith.constant 0 : index
    %4 = vector.load %arg3[%c0_2, %c0_3] : memref<16x128xf32, #tpu.memory_space<vmem>>, vector<16x128xf32>
    %5 = arith.subf %3, %4 : vector<16x128xf32>
    %6 = math.absf %5 : vector<16x128xf32>
    %c0_4 = arith.constant 0 : index
    %c0_5 = arith.constant 0 : index
    %7 = vector.load %arg4[%c0_4, %c0_5] : memref<8x128xf32, #tpu.memory_space<vmem>>, vector<8x128xf32>
    %8 = vector.shape_cast %6 : vector<16x128xf32> to vector<2x8x128xf32>
    %cst = arith.constant dense<0.000000e+00> : vector<8x128xf32>
    %9 = vector.multi_reduction <add>, %8, %cst [0] : vector<2x8x128xf32> to vector<8x128xf32>
    %10 = arith.addf %7, %9 : vector<8x128xf32>
    %c0_6 = arith.constant 0 : index
    %c0_7 = arith.constant 0 : index
    %11 = vector.load %arg4[%c0_6, %c0_7] : memref<8x128xf32, #tpu.memory_space<vmem>>, vector<8x128xf32>
    tpu.vector_store %arg4[%c0_6, %c0_7], %10 {strides = array<i32>} : memref<8x128xf32, #tpu.memory_space<vmem>>, vector<8x128xf32>,
    return
  }
  func.func @transform_0(%arg0: i32, %arg1: i32) -> (i32, i32) {
    %c1_i32 = arith.constant 1 : i32
    %0 = arith.muli %arg0, %c1_i32 : i32
    %1 = arith.addi %0, %arg1 : i32
    %c0_i32 = arith.constant 0 : i32
    %2 = arith.minsi %1, %c0_i32 : i32
    %c0_i32_0 = arith.constant 0 : i32
    %c0_i32_1 = arith.constant 0 : i32
    return %2, %c0_i32_0 : i32, i32
  }
  func.func @transform_1(%arg0: i32, %arg1: i32) -> (i32, i32) {
    %c1_i32 = arith.constant 1 : i32
    %0 = arith.muli %arg0, %c1_i32 : i32
    %1 = arith.addi %0, %arg1 : i32
    %c0_i32 = arith.constant 0 : i32
    %2 = arith.minsi %1, %c0_i32 : i32
    %c0_i32_0 = arith.constant 0 : i32
    %c0_i32_1 = arith.constant 0 : i32
    return %2, %c0_i32_0 : i32, i32
  }
  func.func @transform_2(%arg0: i32, %arg1: i32) -> (i32, i32) {
    %c0_i32 = arith.constant 0 : i32
    %c0_i32_0 = arith.constant 0 : i32
    return %arg0, %c0_i32 : i32, i32
  }
}

</mosaic_0001>

<llo_original>
// kernel: color_loss.1
$region0: #{color_loss.1}
  #allocation0 [shape = 'u32[]', space=smem, size = 0x4, offset = 0x4, fixed_abs, tag = 'smem constant byte address 0x4 - core index']
  #allocation1 [shape = 'u32[144,128]{1,0:T(1,128)}', space=vmem, size = 0x12000, scoped, tag = 'internal scratch']
  %s0 = inlined_call_operand.vmem [shape: f32[16,128], index: 0, kind: input, shape index: {}]
  %s1 = inlined_call_operand.vmem [shape: f32[16,128], index: 1, kind: input, shape index: {}]
  %s2 = inlined_call_operand.vmem [shape: f32[8,128], index: 2, kind: output, shape index: {}]
  %s3 = sld [smem:[#allocation0]]
  $region22: #{color_loss.1} parent=0
    _
  %s5 = ssub.s32 1, %s3
  %s6 = scalar_select 0, %s5, %s3
  // Predicated region
  $region2: #{color_loss.1} parent=0 // pred_check
    _
  $region3: #{color_loss.1} parent=0 // pred_check_branch
    %8 = sbr.rel (0) target = $region5
  $region4: #{color_loss.1} parent=0 // pred_region
    %s9 = sadd.s32 0, 0
    %p10 = scmp.lt.s32.totalorder %s9, 0
    %s11 = scalar_select %p10, %s9, 0
    %s12 = smul.u32 2, %s11
    %p13 = scmp.lt.s32.totalorder %s12, 1
    %s14 = scalar_select %p13, %s12, 1
    %s15 = smul.addr %s14, 8
    %s16 = scalar_lea.vmem %s0, %s15
    %s17 = sadd.s32 0, 0
    %p18 = scmp.lt.s32.totalorder %s17, 0
    %s19 = scalar_select %p18, %s17, 0
    %s20 = smul.u32 2, %s19
  $region5: #{color_loss.1} parent=0 // pred_fallthru
    _
  // Predicated region
  $region6: #{color_loss.1} parent=0 // pred_check
    _
  $region7: #{color_loss.1} parent=0 // pred_check_branch
    %22 = sbr.rel (0) target = $region9
  $region8: #{color_loss.1} parent=0 // pred_region
    %s23 = sadd.s32 0, 0
    %p24 = scmp.lt.s32.totalorder %s23, 0
    %s25 = scalar_select %p24, %s23, 0
    %s26 = smul.u32 2, %s25
    %p27 = scmp.lt.s32.totalorder %s26, 1
    %s28 = scalar_select %p27, %s26, 1
    %s29 = smul.addr %s28, 8
    %s30 = scalar_lea.vmem %s1, %s29
    %s31 = sadd.s32 0, 0
    %p32 = scmp.lt.s32.totalorder %s31, 0
    %s33 = scalar_select %p32, %s31, 0
    %s34 = smul.u32 2, %s33
  $region9: #{color_loss.1} parent=0 // pred_fallthru
    _
  %s35 = sadd.s32 0, 0
  %p36 = scmp.lt.s32.totalorder %s35, 0
  %s37 = scalar_select %p36, %s35, 0
  %s38 = smul.u32 2, %s37
  %p39 = scmp.lt.s32.totalorder %s38, 1
  %s40 = scalar_select %p39, %s38, 1
  %s41 = smul.addr %s40, 8
  %s42 = scalar_lea.vmem %s0, %s41
  %s43 = sadd.s32 0, 0
  %p44 = scmp.lt.s32.totalorder %s43, 0
  %s45 = scalar_select %p44, %s43, 0
  %s46 = smul.u32 2, %s45
  %p47 = scmp.lt.s32.totalorder %s46, 1
  %s48 = scalar_select %p47, %s46, 1
  %s49 = smul.addr %s48, 8
  %s50 = scalar_lea.vmem %s1, %s49
  %s51 = sadd.s32 0, 0
  %p52 = scmp.lt.s32.totalorder %s51, 0
  %s53 = scalar_select %p52, %s51, 0
  %s54 = smul.u32 2, %s53
  %p55 = scmp.lt.s32.totalorder %s54, 1
  %s56 = scalar_select %p55, %s54, 1
  %s57 = smul.addr %s56, 8
  %s58 = scalar_lea.vmem %s0, %s57
  %s59 = sadd.s32 0, 0
  %p60 = scmp.lt.s32.totalorder %s59, 0
  %s61 = scalar_select %p60, %s59, 0
  %s62 = smul.u32 2, %s61
  %s63 = sadd.s32 0, 0
  %p64 = scmp.lt.s32.totalorder %s63, 0
  %s65 = scalar_select %p64, %s63, 0
  %s66 = smul.u32 2, %s65
  %p67 = scmp.lt.s32.totalorder %s66, 1
  %s68 = scalar_select %p67, %s66, 1
  %s69 = smul.addr %s68, 8
  %s70 = scalar_lea.vmem %s1, %s69
  %s71 = sadd.s32 0, 0
  %p72 = scmp.lt.s32.totalorder %s71, 0
  %s73 = scalar_select %p72, %s71, 0
  %s74 = smul.u32 2, %s73
  %p75 = scmp.eq.s32.totalorder 0, 0
  // Predicated region
  $region10: #{color_loss.1} parent=0 // pred_check
    %p76 = pneg %p75
  $region11: #{color_loss.1} parent=0 // pred_check_branch
    %78 = sbr.rel (%p76) target = $region13
  $region12: #{color_loss.1} parent=0 // pred_region
    %79 = vst [vmem:[%s2] sm:$0xff] 0.0
  $region13: #{color_loss.1} parent=0 // pred_fallthru
    _
  %v80 = vld [vmem:[%s58] sm:$0xff]
  %v81 = vld [vmem:[%s58 + $0x8] sm:$0xff]
  %v82 = vld [vmem:[%s70] sm:$0xff]
  %v83 = vld [vmem:[%s70 + $0x8] sm:$0xff]
  %v84 = vsub.f32 %v80, %v82
  %v85 = vsub.f32 %v81, %v83
  %v86 = vand.u32 2147483647, %v84
  %v87 = vand.u32 2147483647, %v85
  %v88 = vld [vmem:[%s2] sm:$0xff]
  %v89 = vadd.f32 %v86, %v87
  %v90 = vadd.f32 %v88, %v89
  %91 = vst [vmem:[%s2] sm:$0xff] %v90
  // Predicated region
  $region14: #{color_loss.1} parent=0 // pred_check
    _
  $region15: #{color_loss.1} parent=0 // pred_check_branch
    %93 = sbr.rel (0) target = $region17
  $region16: #{color_loss.1} parent=0 // pred_region
    _
  $region17: #{color_loss.1} parent=0 // pred_fallthru
    _
  // Predicated region
  $region18: #{color_loss.1} parent=0 // pred_check
    _
  $region19: #{color_loss.1} parent=0 // pred_check_branch
    %95 = sbr.rel (0) target = $region21
  $region20: #{color_loss.1} parent=0 // pred_region
    _
  $region21: #{color_loss.1} parent=0 // pred_fallthru
    _

</llo_original>
